<compile_context>
chip_gen: v6e
topology: v6e:2x2x1
jax: 0.10.0
libtpu: 0.0.40
codegen_flags: <defaults>
</compile_context>

<pallas_src>
import numpy as np
import jax
import jax.numpy as jnp
from jax.experimental import pallas as pl
from jax.experimental.pallas import tpu as pltpu


def _round_up(n, m):
    return ((n + m - 1) // m) * m


def _choose_item_tiling(num_items, item_tile):
    """Pick (padded_num_items, item_tile): ti | nip, both multiples of 128,
    keeping padding waste small even when item_tile >> 128."""
    item_tile = max(128, _round_up(item_tile, 128))
    nip128 = _round_up(num_items, 128)
    if nip128 <= item_tile:
        return nip128, nip128
    # Candidate A: zero extra padding; ti = largest 128-multiple divisor of nip128.
    ti_div = 128
    for t in range(item_tile, 127, -128):
        if nip128 % t == 0:
            ti_div = t
            break
    # Candidate B: pad up to a multiple of item_tile (waste <= item_tile - 1 cols).
    nip_b = _round_up(num_items, item_tile)
    if ti_div >= 512 or (nip_b - nip128) * 8 > nip128:
        return nip128, ti_div
    return nip_b, item_tile


def autorec_kernel(x_ref, w1t_ref, b1_ref, w2t_ref, b2_ref, out_ref, h_ref):
    """Grid = (batch_tiles, item_tiles).  h_ref: VMEM scratch (tb, hp), bf16."""
    j = pl.program_id(1)

    # Encoder: x / W1^T blocks stay resident across the item-tile axis for a
    # given batch tile, so compute h only on the first item tile.
    @pl.when(j == 0)
    def _():
        xb = x_ref[...].astype(w1t_ref.dtype)       # in-kernel cast (f32 or bf16 input)
        pre = jnp.dot(xb, w1t_ref[...], preferred_element_type=jnp.float32)
        # Bias + sigmoid in f32 (v5e has no bf16 VPU/EUP); store bf16 once.
        h_ref[...] = jax.nn.sigmoid(pre + b1_ref[...]).astype(h_ref.dtype)

    # Decoder for this item tile; bias add fused with the (final-dtype) store.
    out = jnp.dot(h_ref[...], w2t_ref[...], preferred_element_type=jnp.float32)
    out_ref[...] = (out + b2_ref[...]).astype(out_ref.dtype)


def prepare_params(w1, b1, w2, b2, *, item_tile=1024, compute_dtype=jnp.bfloat16):
    """One-time transpose + zero-pad + cast of the weights (outside hot path).

    w1: (hidden, num_items), b1: (hidden,), w2: (num_items, hidden), b2: (num_items,)
    """
    hidden, num_items = w1.shape
    hp = _round_up(hidden, 128)                  # lane-dense hidden intermediate
    nip, ti = _choose_item_tiling(num_items, item_tile)

    w1t = jnp.zeros((nip, hp), compute_dtype)
    w1t = w1t.at[:num_items, :hidden].set(w1.T.astype(compute_dtype))
    # Zero rows of W2^T over the padded hidden range make the padded h entries
    # (sigmoid(0) = 0.5) contribute exactly 0 to the decoder output.
    w2t = jnp.zeros((hp, nip), compute_dtype)
    w2t = w2t.at[:hidden, :num_items].set(w2.T.astype(compute_dtype))

    b1p = jnp.zeros((1, hp), jnp.float32).at[0, :hidden].set(b1.astype(jnp.float32))
    b2p = jnp.zeros((1, nip), jnp.float32).at[0, :num_items].set(b2.astype(jnp.float32))

    return dict(w1t=w1t, b1=b1p, w2t=w2t, b2=b2p,
                hidden=hidden, num_items=num_items,
                item_tile=ti, compute_dtype=compute_dtype)


def autorec_forward(x, params, *, batch_tile=256, out_dtype=None):
    """x: (B, num_items) -> (B, num_items); same semantics as the PyTorch module."""
    w1t, b1, w2t, b2 = params["w1t"], params["b1"], params["w2t"], params["b2"]
    num_items = params["num_items"]
    ti = params["item_tile"]
    cdt = params["compute_dtype"]
    out_dtype = x.dtype if out_dtype is None else out_dtype

    B = x.shape[0]
    nip, hp = w1t.shape

    # Batch tile: big enough to feed the MXU, but never inflate a tiny batch.
    tb = min(_round_up(batch_tile, 8), _round_up(B, 8))

    # Generation-safe VMEM budget; shrink tb first if the footprint is too big.
    def _vmem_need(tb_):
        return (2 * tb_ * nip * x.dtype.itemsize                 # x tile (dbl-buffered)
                + 2 * nip * hp * 2                                # W1^T (bf16)
                + 2 * hp * ti * 2                                 # W2^T tile
                + 2 * tb_ * ti * np.dtype(out_dtype).itemsize     # out tile
                + tb_ * hp * 2                                    # h scratch (bf16)
                + 2 * (hp + nip) * 4)                             # biases
    budget = 44 * 1024 * 1024
    while tb > 8 and _vmem_need(tb) > budget:
        tb = max(8, _round_up(tb // 2, 8))
    bp = _round_up(B, tb)

    # Fast path: skip the wrapper pad/cast passes when shapes are already
    # aligned (the kernel casts x to the compute dtype internally).
    if bp == B and nip == x.shape[1]:
        x_p = x
    else:
        x_p = jnp.zeros((bp, nip), x.dtype).at[:B, :x.shape[1]].set(x)

    grid = (bp // tb, nip // ti)

    try:
        vmem_cap = pltpu.get_tpu_info().vmem_capacity_bytes
    except Exception:
        vmem_cap = 64 * 1024 * 1024               # conservative (v7x per-TC)
    vmem_limit = int(min(max(2 * _vmem_need(tb), 32 * 1024 * 1024),
                         (vmem_cap * 3) // 4))

    out_p = pl.pallas_call(
        autorec_kernel,
        out_shape=jax.ShapeDtypeStruct((bp, nip), out_dtype),
        grid_spec=pltpu.PrefetchScalarGridSpec(
            num_scalar_prefetch=0,
            grid=grid,
            in_specs=[
                pl.BlockSpec((tb, nip), lambda i, j: (i, 0)),   # x (resident per batch tile)
                pl.BlockSpec((nip, hp), lambda i, j: (0, 0)),   # W1^T (resident)
                pl.BlockSpec((1, hp),   lambda i, j: (0, 0)),   # b1
                pl.BlockSpec((hp, ti),  lambda i, j: (0, j)),   # W2^T tile (streamed)
                pl.BlockSpec((1, ti),   lambda i, j: (0, j)),   # b2 tile
            ],
            out_specs=pl.BlockSpec((tb, ti), lambda i, j: (i, j)),
            scratch_shapes=[pltpu.VMEM((tb, hp), cdt)],
        ),
        compiler_params=pltpu.CompilerParams(
            # Item axis must stay "arbitrary": h scratch is written only on j == 0.
            dimension_semantics=("parallel", "arbitrary"),
            vmem_limit_bytes=vmem_limit,
        ),
    )(x_p, w1t, b1, w2t, b2)

    if bp == B and nip == num_items:
        return out_p
    return out_p[:B, :num_items]


def init_params(key, hidden_dim, num_items, dtype=jnp.float32):
    """PyTorch-style Linear init: U(-1/sqrt(fan_in), 1/sqrt(fan_in))."""
    k1, k2, k3, k4 = jax.random.split(key, 4)
    bound1 = 1.0 / jnp.sqrt(num_items)   # encoder fan_in = num_items
    bound2 = 1.0 / jnp.sqrt(hidden_dim)  # decoder fan_in = hidden_dim
    w1 = jax.random.uniform(k1, (hidden_dim, num_items), dtype, -bound1, bound1)
    b1 = jax.random.uniform(k2, (hidden_dim,), dtype, -bound1, bound1)
    w2 = jax.random.uniform(k3, (num_items, hidden_dim), dtype, -bound2, bound2)
    b2 = jax.random.uniform(k4, (num_items,), dtype, -bound2, bound2)
    return w1, b1, w2, b2


def _check(out, x, w1, b1, w2, b2):
    f32 = jnp.float32
    # Tight check vs. a reference applying the same bf16 rounding the kernel uses.
    xb = x.astype(jnp.bfloat16).astype(f32)
    w1b = w1.astype(jnp.bfloat16).astype(f32)
    w2b = w2.astype(jnp.bfloat16).astype(f32)
    hb = jax.nn.sigmoid(xb @ w1b.T + b1).astype(jnp.bfloat16).astype(f32)
    ref_bf16 = hb @ w2b.T + b2
    assert jnp.allclose(out.astype(f32), ref_bf16, atol=2e-3, rtol=2e-3)
    # Loose check vs. the exact f32 reference (kernel uses bf16 weights/activations).
    ref_f32 = jax.nn.sigmoid(x @ w1.T + b1) @ w2.T + b2
    assert jnp.allclose(out.astype(f32), ref_f32, atol=3e-2, rtol=3e-2)


if __name__ == "__main__":
    key = jax.random.PRNGKey(0)

    # Case 1: aligned shapes (fast path, single tile per axis).
    batch, num_items, hidden_dim = 8, 256, 32
    kx, kp, key = jax.random.split(key, 3)
    x = jax.random.uniform(kx, (batch, num_items), jnp.float32)
    w1, b1, w2, b2 = init_params(kp, hidden_dim, num_items)
    params = prepare_params(w1, b1, w2, b2)
    out = jax.block_until_ready(autorec_forward(x, params))
    assert out.shape == (batch, num_items) and out.dtype == x.dtype
    _check(out, x, w1, b1, w2, b2)

    # Case 2: unaligned shapes (padding path) with a multi-tile grid.
    batch, num_items, hidden_dim = 20, 300, 32
    kx, kp, key = jax.random.split(key, 3)
    x = jax.random.uniform(kx, (batch, num_items), jnp.float32)
    w1, b1, w2, b2 = init_params(kp, hidden_dim, num_items)
    params = prepare_params(w1, b1, w2, b2, item_tile=128)
    out = jax.block_until_ready(autorec_forward(x, params, batch_tile=8))
    assert out.shape == (batch, num_items) and out.dtype == x.dtype
    _check(out, x, w1, b1, w2, b2)

    print("KERNEL_OK")
</pallas_src>

<mosaic_0001>
module attributes {stable_mosaic.version = 11 : i64} {
  func.func @autorec_kernel(%arg0: i32, %arg1: i32, %arg2: memref<8x256xf32, #tpu.memory_space<vmem>>, %arg3: memref<256x128xbf16, #tpu.memory_space<vmem>>, %arg4: memref<1x128xf32, #tpu.memory_space<vmem>>, %arg5: memref<128x256xbf16, #tpu.memory_space<vmem>>, %arg6: memref<1x256xf32, #tpu.memory_space<vmem>>, %arg7: memref<8x256xf32, #tpu.memory_space<vmem>>, %arg8: memref<8x128xbf16, #tpu.memory_space<vmem>>) attributes {dimension_semantics = [#tpu.dimension_semantics<parallel>, #tpu.dimension_semantics<arbitrary>], iteration_bounds = array<i64: 1, 1>, scalar_prefetch = 0 : i64, scratch_operands = 1 : i64, tpu.core_type = #tpu.core_type<tc>, window_params = [{transform_indices = @transform_0, window_bounds = array<i64: 8, 256>}, {pipeline_mode = #tpu.pipeline_mode<synchronous>, transform_indices = @transform_1, window_bounds = array<i64: 256, 128>}, {pipeline_mode = #tpu.pipeline_mode<synchronous>, transform_indices = @transform_2, window_bounds = array<i64: 1, 128>}, {transform_indices = @transform_3, window_bounds = array<i64: 128, 256>}, {transform_indices = @transform_4, window_bounds = array<i64: 1, 256>}, {transform_indices = @transform_5, window_bounds = array<i64: 8, 256>}]} {
    %c0_i32 = arith.constant 0 : i32
    %0 = arith.cmpi eq, %arg1, %c0_i32 : i32
    %1 = arith.extui %0 : i1 to i32
    %c0_i32_0 = arith.constant 0 : i32
    %2 = arith.cmpi ne, %1, %c0_i32_0 : i32
    scf.if %2 {
      %c0_8 = arith.constant 0 : index
      %c0_9 = arith.constant 0 : index
      %10 = vector.load %arg2[%c0_8, %c0_9] : memref<8x256xf32, #tpu.memory_space<vmem>>, vector<8x256xf32>
      %11 = arith.truncf %10 : vector<8x256xf32> to vector<8x256xbf16>
      %c0_10 = arith.constant 0 : index
      %c0_11 = arith.constant 0 : index
      %12 = vector.load %arg3[%c0_10, %c0_11] : memref<256x128xbf16, #tpu.memory_space<vmem>>, vector<256x128xbf16>
      %cst_12 = arith.constant dense<0.000000e+00> : vector<8x128xf32>
      %13 = tpu.matmul %11, %12, %cst_12 {dimension_numbers = #tpu.dot_dimension_numbers<[1], [0], [0], [1], [0, 0, 1, 1], [], []>} : vector<8x256xbf16>, vector<256x128xbf16>, vector<8x128xf32> -> vector<8x128xf32>
      %c0_13 = arith.constant 0 : index
      %c0_14 = arith.constant 0 : index
      %14 = vector.load %arg4[%c0_13, %c0_14] : memref<1x128xf32, #tpu.memory_space<vmem>>, vector<1x128xf32>
      %15 = vector.broadcast %14 : vector<1x128xf32> to vector<8x128xf32>
      %16 = arith.addf %13, %15 : vector<8x128xf32>
      %17 = arith.negf %16 : vector<8x128xf32>
      %18 = math.exp %17 : vector<8x128xf32>
      %cst_15 = arith.constant 1.000000e+00 : f32
      %19 = vector.broadcast %cst_15 : f32 to vector<8x128xf32>
      %20 = arith.addf %19, %18 : vector<8x128xf32>
      %21 = arith.divf %19, %20 : vector<8x128xf32>
      %22 = arith.truncf %21 : vector<8x128xf32> to vector<8x128xbf16>
      %c0_16 = arith.constant 0 : index
      %c0_17 = arith.constant 0 : index
      %23 = vector.load %arg8[%c0_16, %c0_17] : memref<8x128xbf16, #tpu.memory_space<vmem>>, vector<8x128xbf16>
      tpu.vector_store %arg8[%c0_16, %c0_17], %22 {strides = array<i32>} : memref<8x128xbf16, #tpu.memory_space<vmem>>, vector<8x128xbf16>,
    } else {
    }
    %c0 = arith.constant 0 : index
    %c0_1 = arith.constant 0 : index
    %3 = vector.load %arg8[%c0, %c0_1] : memref<8x128xbf16, #tpu.memory_space<vmem>>, vector<8x128xbf16>
    %c0_2 = arith.constant 0 : index
    %c0_3 = arith.constant 0 : index
    %4 = vector.load %arg5[%c0_2, %c0_3] : memref<128x256xbf16, #tpu.memory_space<vmem>>, vector<128x256xbf16>
    %cst = arith.constant dense<0.000000e+00> : vector<8x256xf32>
    %5 = tpu.matmul %3, %4, %cst {dimension_numbers = #tpu.dot_dimension_numbers<[1], [0], [0], [1], [0, 0, 1, 1], [], []>} : vector<8x128xbf16>, vector<128x256xbf16>, vector<8x256xf32> -> vector<8x256xf32>
    %c0_4 = arith.constant 0 : index
    %c0_5 = arith.constant 0 : index
    %6 = vector.load %arg6[%c0_4, %c0_5] : memref<1x256xf32, #tpu.memory_space<vmem>>, vector<1x256xf32>
    %7 = vector.broadcast %6 : vector<1x256xf32> to vector<8x256xf32>
    %8 = arith.addf %5, %7 : vector<8x256xf32>
    %c0_6 = arith.constant 0 : index
    %c0_7 = arith.constant 0 : index
    %9 = vector.load %arg7[%c0_6, %c0_7] : memref<8x256xf32, #tpu.memory_space<vmem>>, vector<8x256xf32>
    tpu.vector_store %arg7[%c0_6, %c0_7], %8 {strides = array<i32>} : memref<8x256xf32, #tpu.memory_space<vmem>>, vector<8x256xf32>,
    return
  }
  func.func @transform_0(%arg0: i32, %arg1: i32) -> (i32, i32) {
    %c0_i32 = arith.constant 0 : i32
    %c0_i32_0 = arith.constant 0 : i32
    return %arg0, %c0_i32 : i32, i32
  }
  func.func @transform_1(%arg0: i32, %arg1: i32) -> (i32, i32) {
    %c0_i32 = arith.constant 0 : i32
    %c0_i32_0 = arith.constant 0 : i32
    %c0_i32_1 = arith.constant 0 : i32
    return %c0_i32, %c0_i32_0 : i32, i32
  }
  func.func @transform_2(%arg0: i32, %arg1: i32) -> (i32, i32) {
    %c0_i32 = arith.constant 0 : i32
    %c0_i32_0 = arith.constant 0 : i32
    %c0_i32_1 = arith.constant 0 : i32
    return %c0_i32, %c0_i32_0 : i32, i32
  }
  func.func @transform_3(%arg0: i32, %arg1: i32) -> (i32, i32) {
    %c0_i32 = arith.constant 0 : i32
    %c0_i32_0 = arith.constant 0 : i32
    return %c0_i32, %arg1 : i32, i32
  }
  func.func @transform_4(%arg0: i32, %arg1: i32) -> (i32, i32) {
    %c0_i32 = arith.constant 0 : i32
    %c0_i32_0 = arith.constant 0 : i32
    return %c0_i32, %arg1 : i32, i32
  }
  func.func @transform_5(%arg0: i32, %arg1: i32) -> (i32, i32) {
    %c0_i32 = arith.constant 0 : i32
    return %arg0, %arg1 : i32, i32
  }
}

</mosaic_0001>

<llo_original>
// kernel: tpu_custom_call.1
$region0: #{tpu_custom_call.1}
  #allocation0 [shape = 'u32[]', space=smem, size = 0x4, offset = 0x4, fixed_abs, tag = 'smem constant byte address 0x4 - core index']
  #allocation1 [shape = 'u32[144,128]{1,0:T(1,128)}', space=vmem, size = 0x12000, scoped, tag = 'internal scratch']
  #allocation2 [shape = 'bf16[8,128]{1,0:T(8,128)(2,1)}', space=vmem, size = 0x800, scoped, tag = 'scratch operand']
  %s0 = inlined_call_operand.hbm [shape: f32[8,256], index: 0, kind: input, shape index: {}]
  %s1 = inlined_call_operand.hbm [shape: bf16[256,128], index: 1, kind: input, shape index: {}]
  %s2 = inlined_call_operand.vmem [shape: f32[1,128], index: 2, kind: input, shape index: {}]
  %s3 = inlined_call_operand.hbm [shape: bf16[128,256], index: 3, kind: input, shape index: {}]
  %s4 = inlined_call_operand.vmem [shape: f32[1,256], index: 4, kind: input, shape index: {}]
  %s5 = inlined_call_operand.hbm [shape: f32[8,256], index: 5, kind: output, shape index: {}]
  %s6 = sld [smem:[#allocation0]]
  $region46: #{tpu_custom_call.1} parent=0
    _
  %s8 = ssub.s32 1, %s6
  %s9 = scalar_select 0, %s8, %s6
  $region1: #{tpu_custom_call.1} parent=0
    #allocation3 [shape = 'u8[8192]{0}', space=vmem, size = 0x2000, scoped, tag = 'input window, operand 0, single buffered']
    #allocation4 [shape = 's32[1]{0}', space=sflag, size = 0x4, scoped, tag = 'scoped memory for tpu_custom_call.1']
    #allocation5 [shape = 's32[1]{0}', space=sflag, size = 0x4, scoped, tag = 'scoped memory for tpu_custom_call.1']
    #allocation6 [shape = 'u8[65536]{0}', space=vmem, size = 0x10000, scoped, tag = 'input window, operand 1, single buffered']
    #allocation7 [shape = 's32[1]{0}', space=sflag, size = 0x4, scoped, tag = 'scoped memory for tpu_custom_call.1']
    #allocation8 [shape = 'u8[65536]{0}', space=vmem, size = 0x10000, scoped, tag = 'input window, operand 3, single buffered']
    #allocation9 [shape = 'u8[8192]{0}', space=vmem, size = 0x2000, scoped, tag = 'output window, operand 0, single buffered']
    %10 = vsyncpa [#allocation4], 0
    %11 = vsyncpa [#allocation7], 0
    %12 = vsyncpa [#allocation5], 0
    // Predicated region
    $region2: #{tpu_custom_call.1} parent=1 // pred_check
      _
    $region3: #{tpu_custom_call.1} parent=1 // pred_check_branch
      %14 = sbr.rel (0) target = $region5
    $region4: #{tpu_custom_call.1} parent=1 // pred_region
      %s16 = ssub.s32 256, 256
      %17 = vsyncadd [#allocation4], %s16
      %s19 = sshll.u32 [#allocation3], 4
      %s20 = int_to_ptr.vmem [resolvable:$true] %s19
      %22 = dma.hbm_to_vmem [thread:$0]  %s0, 256, %s20, [#allocation4]
    $region5: #{tpu_custom_call.1} parent=1 // pred_fallthru
      _
    // Predicated region
    $region6: #{tpu_custom_call.1} parent=1 // pred_check
      _
    $region7: #{tpu_custom_call.1} parent=1 // pred_check_branch
      %24 = sbr.rel (0) target = $region9
    $region8: #{tpu_custom_call.1} parent=1 // pred_region
      %s26 = ssub.s32 2048, 2048
      %27 = vsyncadd [#allocation7], %s26
      %s28 = sshll.u32 [#allocation6], 4
      %s29 = int_to_ptr.vmem [resolvable:$true] %s28
      %34 = dma.hbm_to_vmem [thread:$0]  %s1, 2048, %s29, [#allocation7], 64, 64, 4
    $region9: #{tpu_custom_call.1} parent=1 // pred_fallthru
      _
    // Predicated region
    $region10: #{tpu_custom_call.1} parent=1 // pred_check
      _
    $region11: #{tpu_custom_call.1} parent=1 // pred_check_branch
      %36 = sbr.rel (0) target = $region13
    $region12: #{tpu_custom_call.1} parent=1 // pred_region
      _
    $region13: #{tpu_custom_call.1} parent=1 // pred_fallthru
      _
    // Predicated region
    $region14: #{tpu_custom_call.1} parent=1 // pred_check
      _
    $region15: #{tpu_custom_call.1} parent=1 // pred_check_branch
      %38 = sbr.rel (0) target = $region17
    $region16: #{tpu_custom_call.1} parent=1 // pred_region
      %s40 = ssub.s32 2048, 2048
      %41 = vsyncadd [#allocation7], %s40
      %s42 = sshll.u32 [#allocation8], 4
      %s43 = int_to_ptr.vmem [resolvable:$true] %s42
      %48 = dma.hbm_to_vmem [thread:$0]  %s3, 2048, %s43, [#allocation7], 128, 128, 8
    $region17: #{tpu_custom_call.1} parent=1 // pred_fallthru
      _
    // Predicated region
    $region18: #{tpu_custom_call.1} parent=1 // pred_check
      _
    $region19: #{tpu_custom_call.1} parent=1 // pred_check_branch
      %50 = sbr.rel (0) target = $region21
    $region20: #{tpu_custom_call.1} parent=1 // pred_region
      _
    $region21: #{tpu_custom_call.1} parent=1 // pred_fallthru
      _
    // Predicated region
    $region22: #{tpu_custom_call.1} parent=1 // pred_check
      _
    $region23: #{tpu_custom_call.1} parent=1 // pred_check_branch
      %52 = sbr.rel (0) target = $region25
    $region24: #{tpu_custom_call.1} parent=1 // pred_region
      %53 = dma.done [#allocation4], 256
    $region25: #{tpu_custom_call.1} parent=1 // pred_fallthru
      _
    // Predicated region
    $region26: #{tpu_custom_call.1} parent=1 // pred_check
      _
    $region27: #{tpu_custom_call.1} parent=1 // pred_check_branch
      %55 = sbr.rel (0) target = $region29
    $region28: #{tpu_custom_call.1} parent=1 // pred_region
      %56 = dma.done [#allocation7], 2048
    $region29: #{tpu_custom_call.1} parent=1 // pred_fallthru
      _
    // Predicated region
    $region30: #{tpu_custom_call.1} parent=1 // pred_check
      _
    $region31: #{tpu_custom_call.1} parent=1 // pred_check_branch
      %58 = sbr.rel (0) target = $region33
    $region32: #{tpu_custom_call.1} parent=1 // pred_region
      %59 = dma.done [#allocation7], 2048
    $region33: #{tpu_custom_call.1} parent=1 // pred_fallthru
      _
    %p61 = scmp.eq.s32.totalorder 0, 0
    // Predicated region
    $region34: #{tpu_custom_call.1} parent=1 // pred_check
      %p62 = pneg %p61
    $region35: #{tpu_custom_call.1} parent=1 // pred_check_branch
      %64 = sbr.rel (%p62) target = $region37
    $region36: #{tpu_custom_call.1} parent=1 // pred_region
      %v65 = vld [vmem:[#allocation3] sm:$0xff]
      %v66 = vld [vmem:[#allocation3 + $0x8] sm:$0xff]
      %v67 = vpack.c.bf16 %v65, %v65
      %v68 = vpack.c.bf16 %v66, %v66
      %v69 = vld [vmem:[#allocation6] sm:$0xf]
      %v70 = vld [vmem:[#allocation6 + $0x4] sm:$0xf]
      %v71 = vld [vmem:[#allocation6 + $0x8] sm:$0xf]
      %v72 = vld [vmem:[#allocation6 + $0xc] sm:$0xf]
      %v73 = vld [vmem:[#allocation6 + $0x10] sm:$0xf]
      %v74 = vld [vmem:[#allocation6 + $0x14] sm:$0xf]
      %v75 = vld [vmem:[#allocation6 + $0x18] sm:$0xf]
      %v76 = vld [vmem:[#allocation6 + $0x1c] sm:$0xf]
      %v77 = vld [vmem:[#allocation6 + $0x20] sm:$0xf]
      %v78 = vld [vmem:[#allocation6 + $0x24] sm:$0xf]
      %v79 = vld [vmem:[#allocation6 + $0x28] sm:$0xf]
      %v80 = vld [vmem:[#allocation6 + $0x2c] sm:$0xf]
      %v81 = vld [vmem:[#allocation6 + $0x30] sm:$0xf]
      %v82 = vld [vmem:[#allocation6 + $0x34] sm:$0xf]
      %v83 = vld [vmem:[#allocation6 + $0x38] sm:$0xf]
      %v84 = vld [vmem:[#allocation6 + $0x3c] sm:$0xf]
      %v85 = vld [vmem:[#allocation6 + $0x40] sm:$0xf]
      %v86 = vld [vmem:[#allocation6 + $0x44] sm:$0xf]
      %v87 = vld [vmem:[#allocation6 + $0x48] sm:$0xf]
      %v88 = vld [vmem:[#allocation6 + $0x4c] sm:$0xf]
      %v89 = vld [vmem:[#allocation6 + $0x50] sm:$0xf]
      %v90 = vld [vmem:[#allocation6 + $0x54] sm:$0xf]
      %v91 = vld [vmem:[#allocation6 + $0x58] sm:$0xf]
      %v92 = vld [vmem:[#allocation6 + $0x5c] sm:$0xf]
      %v93 = vld [vmem:[#allocation6 + $0x60] sm:$0xf]
      %v94 = vld [vmem:[#allocation6 + $0x64] sm:$0xf]
      %v95 = vld [vmem:[#allocation6 + $0x68] sm:$0xf]
      %v96 = vld [vmem:[#allocation6 + $0x6c] sm:$0xf]
      %v97 = vld [vmem:[#allocation6 + $0x70] sm:$0xf]
      %v98 = vld [vmem:[#allocation6 + $0x74] sm:$0xf]
      %v99 = vld [vmem:[#allocation6 + $0x78] sm:$0xf]
      %v100 = vld [vmem:[#allocation6 + $0x7c] sm:$0xf]
      %v101 = vld [vmem:[%s2] sm:$0x1]
      %v103 = vlaneseq
      %v104 = vshrl.u32 %v103, 7
      %v105 = vsub.s32 0, %v104
      %v106 = vrot.slane %v101, %v105
      %v140 = vunpack.c.l.b16 %v69
      %v141 = vunpack.c.l.b16 %v70
      %v142 = vunpack.c.l.b16 %v71
      %v143 = vunpack.c.l.b16 %v72
      %v144 = vunpack.c.l.b16 %v73
      %v145 = vunpack.c.l.b16 %v74
      %v146 = vunpack.c.l.b16 %v75
      %v147 = vunpack.c.l.b16 %v76
      %v148 = vunpack.c.l.b16 %v77
      %v149 = vunpack.c.l.b16 %v78
      %v150 = vunpack.c.l.b16 %v79
      %v151 = vunpack.c.l.b16 %v80
      %v152 = vunpack.c.l.b16 %v81
      %v153 = vunpack.c.l.b16 %v82
      %v154 = vunpack.c.l.b16 %v83
      %v155 = vunpack.c.l.b16 %v84
      %v156 = vunpack.c.l.b16 %v85
      %v157 = vunpack.c.l.b16 %v86
      %v158 = vunpack.c.l.b16 %v87
      %v159 = vunpack.c.l.b16 %v88
      %v160 = vunpack.c.l.b16 %v89
      %v161 = vunpack.c.l.b16 %v90
      %v162 = vunpack.c.l.b16 %v91
      %v163 = vunpack.c.l.b16 %v92
      %v164 = vunpack.c.l.b16 %v93
      %v165 = vunpack.c.l.b16 %v94
      %v166 = vunpack.c.l.b16 %v95
      %v167 = vunpack.c.l.b16 %v96
      %v168 = vunpack.c.l.b16 %v97
      %v169 = vunpack.c.l.b16 %v98
      %v170 = vunpack.c.l.b16 %v99
      %v171 = vunpack.c.l.b16 %v100
      %v172 = vpack.c.b16 %v141, %v140
      %v173 = vpack.c.b16 %v143, %v142
      %v174 = vpack.c.b16 %v145, %v144
      %v175 = vpack.c.b16 %v147, %v146
      %v176 = vpack.c.b16 %v149, %v148
      %v177 = vpack.c.b16 %v151, %v150
      %v178 = vpack.c.b16 %v153, %v152
      %v179 = vpack.c.b16 %v155, %v154
      %v180 = vpack.c.b16 %v157, %v156
      %v181 = vpack.c.b16 %v159, %v158
      %v182 = vpack.c.b16 %v161, %v160
      %v183 = vpack.c.b16 %v163, %v162
      %v184 = vpack.c.b16 %v165, %v164
      %v185 = vpack.c.b16 %v167, %v166
      %v186 = vpack.c.b16 %v169, %v168
      %v187 = vpack.c.b16 %v171, %v170
      %204 = vmatprep.subr.bf16.mxu0 0
      %205 = vmatpush1.bf16.msra.mxu0 %v179
      %206 = vmatprep.subr.bf16.mxu0 0
      %207 = vmatpush1.bf16.msra.mxu0 %v178
      %208 = vmatprep.subr.bf16.mxu0 0
      %209 = vmatpush1.bf16.msra.mxu0 %v177
      %210 = vmatprep.subr.bf16.mxu0 0
      %211 = vmatpush1.bf16.msra.mxu0 %v176
      %212 = vmatprep.subr.bf16.mxu0 0
      %213 = vmatpush1.bf16.msra.mxu0 %v175
      %214 = vmatprep.subr.bf16.mxu0 0
      %215 = vmatpush1.bf16.msra.mxu0 %v174
      %216 = vmatprep.subr.bf16.mxu0 0
      %217 = vmatpush1.bf16.msra.mxu0 %v173
      %218 = vmatprep.subr.bf16.mxu0 0
      %219 = vmatpush1.bf16.msra.mxu0 %v172
      %220 = vmatprep.subr.bf16.mxu0 0
      %221 = vmatpush2.bf16.msra.mxu0 %v187
      %222 = vmatprep.subr.bf16.mxu0 0
      %223 = vmatpush2.bf16.msra.mxu0 %v186
      %224 = vmatprep.subr.bf16.mxu0 0
      %225 = vmatpush2.bf16.msra.mxu0 %v185
      %226 = vmatprep.subr.bf16.mxu0 0
      %227 = vmatpush2.bf16.msra.mxu0 %v184
      %228 = vmatprep.subr.bf16.mxu0 0
      %229 = vmatpush2.bf16.msra.mxu0 %v183
      %230 = vmatprep.subr.bf16.mxu0 0
      %231 = vmatpush2.bf16.msra.mxu0 %v182
      %232 = vmatprep.subr.bf16.mxu0 0
      %233 = vmatpush2.bf16.msra.mxu0 %v181
      %234 = vmatprep.subr.bf16.mxu0 0
      %235 = vmatpush2.bf16.msra.mxu0 %v180
      %236 = vmatprep.mubr.bf16.mxu0 %v68
      %237 = vmatmul.mubr.bf16.gmra.mxu0 %v67
      %v238 = vpop.f32.mrf.mxu0
      %v239 = vadd.f32 %v106, %v238
      %v240 = vpop.f32.mrf.mxu0
      %v241 = vpop.f32.mrf.mxu0
      %v242 = vpop.f32.mrf.mxu0
      %243 = vdwg.mxu0
      %v244 = vxor.u32 %v239, 2147483648
      %v245 = vmul.f32 %v244, 1.442695
      %v246 = vpow.pop %v245
      %v247 = vadd.f32 %v246, 1.0
      %v248 = vrcp.pop %v247
      %v249 = vmul.f32 1.0, %v248
      %v250 = vpack.c.bf16 %v249, %v249
      %251 = vst [vmem:[#allocation2] sm:$0xf] %v250
    $region37: #{tpu_custom_call.1} parent=1 // pred_fallthru
      _
    %v252 = vld [vmem:[#allocation2] sm:$0xf]
    %v253 = vld [vmem:[#allocation8] sm:$0xff]
    %v254 = vld [vmem:[#allocation8 + $0x8] sm:$0xff]
    %v255 = vld [vmem:[#allocation8 + $0x10] sm:$0xff]
    %v256 = vld [vmem:[#allocation8 + $0x18] sm:$0xff]
    %v257 = vld [vmem:[#allocation8 + $0x20] sm:$0xff]
    %v258 = vld [vmem:[#allocation8 + $0x28] sm:$0xff]
    %v259 = vld [vmem:[#allocation8 + $0x30] sm:$0xff]
    %v260 = vld [vmem:[#allocation8 + $0x38] sm:$0xff]
    %v261 = vld [vmem:[#allocation8 + $0x40] sm:$0xff]
    %v262 = vld [vmem:[#allocation8 + $0x48] sm:$0xff]
    %v263 = vld [vmem:[#allocation8 + $0x50] sm:$0xff]
    %v264 = vld [vmem:[#allocation8 + $0x58] sm:$0xff]
    %v265 = vld [vmem:[#allocation8 + $0x60] sm:$0xff]
    %v266 = vld [vmem:[#allocation8 + $0x68] sm:$0xff]
    %v267 = vld [vmem:[#allocation8 + $0x70] sm:$0xff]
    %v268 = vld [vmem:[#allocation8 + $0x78] sm:$0xff]
    %v269 = vld [vmem:[%s4] sm:$0x3]
    %v271 = vlaneseq
    %v272 = vshrl.u32 %v271, 7
    %v273 = vsub.s32 0, %v272
    %v274 = vrot.slane %v269, %v273
    %v275 = vlaneseq
    %v276 = vshrl.u32 %v275, 7
    %v277 = vsub.s32 1, %v276
    %v278 = vrot.slane %v269, %v277
    %v297 = vunpack.c.l.b16 %v253
    %v298 = vunpack.c.h.b16 %v253
    %v299 = vunpack.c.l.b16 %v254
    %v300 = vunpack.c.h.b16 %v254
    %v301 = vunpack.c.l.b16 %v255
    %v302 = vunpack.c.h.b16 %v255
    %v303 = vunpack.c.l.b16 %v256
    %v304 = vunpack.c.h.b16 %v256
    %v305 = vunpack.c.l.b16 %v257
    %v306 = vunpack.c.h.b16 %v257
    %v307 = vunpack.c.l.b16 %v258
    %v308 = vunpack.c.h.b16 %v258
    %v309 = vunpack.c.l.b16 %v259
    %v310 = vunpack.c.h.b16 %v259
    %v311 = vunpack.c.l.b16 %v260
    %v312 = vunpack.c.h.b16 %v260
    %v313 = vunpack.c.l.b16 %v261
    %v314 = vunpack.c.h.b16 %v261
    %v315 = vunpack.c.l.b16 %v262
    %v316 = vunpack.c.h.b16 %v262
    %v317 = vunpack.c.l.b16 %v263
    %v318 = vunpack.c.h.b16 %v263
    %v319 = vunpack.c.l.b16 %v264
    %v320 = vunpack.c.h.b16 %v264
    %v321 = vunpack.c.l.b16 %v265
    %v322 = vunpack.c.h.b16 %v265
    %v323 = vunpack.c.l.b16 %v266
    %v324 = vunpack.c.h.b16 %v266
    %v325 = vunpack.c.l.b16 %v267
    %v326 = vunpack.c.h.b16 %v267
    %v327 = vunpack.c.l.b16 %v268
    %v328 = vunpack.c.h.b16 %v268
    %v329 = vpack.c.b16 %v299, %v297
    %v330 = vpack.c.b16 %v300, %v298
    %v331 = vpack.c.b16 %v303, %v301
    %v332 = vpack.c.b16 %v304, %v302
    %v333 = vpack.c.b16 %v307, %v305
    %v334 = vpack.c.b16 %v308, %v306
    %v335 = vpack.c.b16 %v311, %v309
    %v336 = vpack.c.b16 %v312, %v310
    %v337 = vpack.c.b16 %v315, %v313
    %v338 = vpack.c.b16 %v316, %v314
    %v339 = vpack.c.b16 %v319, %v317
    %v340 = vpack.c.b16 %v320, %v318
    %v341 = vpack.c.b16 %v323, %v321
    %v342 = vpack.c.b16 %v324, %v322
    %v343 = vpack.c.b16 %v327, %v325
    %v344 = vpack.c.b16 %v328, %v326
    %361 = vmatprep.subr.bf16.mxu0 %v344
    %362 = vmatpush1.bf16.msra.mxu0 %v343
    %363 = vmatprep.subr.bf16.mxu0 %v342
    %364 = vmatpush1.bf16.msra.mxu0 %v341
    %365 = vmatprep.subr.bf16.mxu0 %v340
    %366 = vmatpush1.bf16.msra.mxu0 %v339
    %367 = vmatprep.subr.bf16.mxu0 %v338
    %368 = vmatpush1.bf16.msra.mxu0 %v337
    %369 = vmatprep.subr.bf16.mxu0 %v336
    %370 = vmatpush1.bf16.msra.mxu0 %v335
    %371 = vmatprep.subr.bf16.mxu0 %v334
    %372 = vmatpush1.bf16.msra.mxu0 %v333
    %373 = vmatprep.subr.bf16.mxu0 %v332
    %374 = vmatpush1.bf16.msra.mxu0 %v331
    %375 = vmatprep.subr.bf16.mxu0 %v330
    %376 = vmatpush1.bf16.msra.mxu0 %v329
    %377 = vmatprep.subr.bf16.mxu0 0
    %378 = vmatpush2.bf16.msra.mxu0 0
    %379 = vmatprep.subr.bf16.mxu0 0
    %380 = vmatpush2.bf16.msra.mxu0 0
    %381 = vmatprep.subr.bf16.mxu0 0
    %382 = vmatpush2.bf16.msra.mxu0 0
    %383 = vmatprep.subr.bf16.mxu0 0
    %384 = vmatpush2.bf16.msra.mxu0 0
    %385 = vmatprep.subr.bf16.mxu0 0
    %386 = vmatpush2.bf16.msra.mxu0 0
    %387 = vmatprep.subr.bf16.mxu0 0
    %388 = vmatpush2.bf16.msra.mxu0 0
    %389 = vmatprep.subr.bf16.mxu0 0
    %390 = vmatpush2.bf16.msra.mxu0 0
    %391 = vmatprep.subr.bf16.mxu0 0
    %392 = vmatpush2.bf16.msra.mxu0 0
    %393 = vmatprep.mubr.bf16.mxu0 0
    %394 = vmatmul.mubr.bf16.gmra.mxu0 %v252
    %v395 = vpop.f32.mrf.mxu0
    %v396 = vadd.f32 %v274, %v395
    %v397 = vpop.f32.mrf.mxu0
    %v398 = vadd.f32 %v278, %v397
    %v399 = vpop.f32.mrf.mxu0
    %v400 = vpop.f32.mrf.mxu0
    %401 = vdwg.mxu0
    %402 = vst [vmem:[#allocation9] sm:$0xff] %v396
    %403 = vst [vmem:[#allocation9 + $0x8] sm:$0xff] %v398
    // Predicated region
    $region38: #{tpu_custom_call.1} parent=1 // pred_check
      _
    $region39: #{tpu_custom_call.1} parent=1 // pred_check_branch
      %405 = sbr.rel (0) target = $region41
    $region40: #{tpu_custom_call.1} parent=1 // pred_region
      %s407 = ssub.s32 256, 256
      %408 = vsyncadd [#allocation5], %s407
      %s410 = sshll.u32 [#allocation9], 4
      %s411 = int_to_ptr.vmem [resolvable:$true] %s410
      %413 = dma.vmem_to_hbm [thread:$0]  %s411, 256, %s5, [#allocation5]
    $region41: #{tpu_custom_call.1} parent=1 // pred_fallthru
      _
    // Predicated region
    $region42: #{tpu_custom_call.1} parent=1 // pred_check
      _
    $region43: #{tpu_custom_call.1} parent=1 // pred_check_branch
      %415 = sbr.rel (0) target = $region45
    $region44: #{tpu_custom_call.1} parent=1 // pred_region
      %416 = dma.done [#allocation5], 256
    $region45: #{tpu_custom_call.1} parent=1 // pred_fallthru
      _
    %417 = vsyncpa [#allocation4], 1
    %418 = vsyncpa [#allocation7], 1
    %419 = vsyncpa [#allocation5], 1

</llo_original>
